<compile_context>
chip_gen: v6e
topology: v6e:2x2x1
jax: 0.10.0
libtpu: 0.0.40
codegen_flags: <defaults>
</compile_context>

<pallas_src>
import math
from functools import partial

import numpy as np
import jax
import jax.numpy as jnp
from jax.experimental import pallas as pl
from jax.experimental.pallas import tpu as pltpu


def _round_up(n, m):
    return ((n + m - 1) // m) * m


def _continuous_encoding_kernel(x_ref, w_ref, out_ref, *, div_term):
    # x_ref:   (tnp, K_pad)  f32 -- packed x rows, augmented with a ones column
    # w_ref:   (K_pad, Wout) f32 -- block-diagonal omega blocks + tiled-bias row
    # out_ref: (tnp, Wout)       -- lane-dense packed output
    z = jnp.dot(x_ref[...], w_ref[...], preferred_element_type=jnp.float32)   # MXU
    out_ref[...] = (div_term * jnp.cos(z)).astype(out_ref.dtype)              # EUP/VPU + dense vst


def continuous_encoding(x, omega, bias, *, out_dtype=jnp.float32,
                        width_target=512, vmem_budget_bytes=24 * 1024 * 1024):
    """x: (B, S) float -> (B, S, E), out[b,s,e] = sqrt(1/E)*cos(x[b,s]*omega[e]+bias[e])."""
    B, S = x.shape
    E = omega.shape[0]
    div_term = math.sqrt(1.0 / E)
    out_dtype = jnp.dtype(out_dtype)

    # ---- packing geometry ----------------------------------------------------------
    # G logical rows per packed output row; G*E must be a multiple of 128 (dense vst).
    g0 = (E * 128 // math.gcd(E, 128)) // E           # smallest G with (G*E) % 128 == 0
    G = g0 * max(1, width_target // (g0 * E))         # widen toward ~width_target lanes
    Wout = G * E
    K = G + 1                                         # +1: ones column carries the bias
    K_pad = _round_up(K, 8)

    SUB = 8 * (4 // out_dtype.itemsize)               # sublane multiple: 8 f32 / 16 bf16

    N = B * S
    NP = -(-N // G)                                   # packed rows needed
    NP_sub = _round_up(max(NP, 1), SUB)

    # ---- tile sizing / VMEM budget (accounts for lane-padded x block) ---------------
    x_row_bytes = _round_up(K_pad, 128) * 4           # real VMEM footprint per x row
    out_row_bytes = Wout * out_dtype.itemsize
    tnp_cap = vmem_budget_bytes // (2 * (x_row_bytes + out_row_bytes))   # double-buffered
    tnp_cap = max(SUB, (tnp_cap // SUB) * SUB)

    num_tiles = -(-NP_sub // tnp_cap)
    if num_tiles > 1 and num_tiles % 2:               # balanced work for v7x's 2 TCs
        num_tiles += 1
    tnp = _round_up(-(-NP_sub // num_tiles), SUB)
    NP_pad = num_tiles * tnp
    N_pad = NP_pad * G

    # ---- operand prep (tiny: O(N) for x, O(K_pad*Wout) for the constant W) ----------
    x_flat = jnp.pad(jnp.ravel(x).astype(jnp.float32), (0, N_pad - N))
    x_packed = x_flat.reshape(NP_pad, G)
    x_aug = jnp.concatenate(
        [x_packed,
         jnp.ones((NP_pad, 1), jnp.float32),
         jnp.zeros((NP_pad, K_pad - K), jnp.float32)], axis=1)          # (NP_pad, K_pad)

    omega_f = omega.astype(jnp.float32).reshape(E)
    bias_f = bias.astype(jnp.float32).reshape(E)
    w_omega = (jnp.eye(G, dtype=jnp.float32)[:, :, None] * omega_f).reshape(G, Wout)
    w_bias = jnp.tile(bias_f, G).reshape(1, Wout)
    w_pad = jnp.zeros((K_pad - K, Wout), jnp.float32)
    w = jnp.concatenate([w_omega, w_bias, w_pad], axis=0)               # (K_pad, Wout)

    out_packed = pl.pallas_call(
        partial(_continuous_encoding_kernel, div_term=div_term),
        out_shape=jax.ShapeDtypeStruct((NP_pad, Wout), out_dtype),
        grid=(num_tiles,),
        in_specs=[
            pl.BlockSpec((tnp, K_pad), lambda i: (i, 0)),
            pl.BlockSpec((K_pad, Wout), lambda i: (0, 0)),
        ],
        out_specs=pl.BlockSpec((tnp, Wout), lambda i: (i, 0)),
        compiler_params=pltpu.CompilerParams(
            dimension_semantics=("parallel",),
            vmem_limit_bytes=40 * 1024 * 1024,
        ),
    )(x_aug, w)

    # (NP_pad, G*E) row-major == (N_pad, E) row-major: free reshape.  The [:N] slice
    # (a copy) only happens when padding rows exist; consumers tolerant of the padded
    # layout should use the packed array directly to skip it.
    out = out_packed.reshape(N_pad, E)
    if N_pad != N:
        out = out[:N]
    return out.reshape(B, S, E)


if __name__ == "__main__":
    embed_size = 32
    B, S = 2, 8

    # Deterministic parameter init (matches nn.Module __init__).
    omega = jnp.asarray(1.0 / 10.0 ** np.linspace(0, 9, embed_size), dtype=jnp.float32)
    bias = jnp.zeros((embed_size,), dtype=jnp.float32)

    # Deterministic input.
    key = jax.random.PRNGKey(0)
    x = jax.random.uniform(key, (B, S), dtype=jnp.float32, minval=0.0, maxval=10.0)

    out = continuous_encoding(x, omega, bias)
    out = jax.block_until_ready(out)

    # Reference check in plain JAX.
    ref = math.sqrt(1.0 / embed_size) * jnp.cos(
        x[..., None] * omega.reshape(1, -1) + bias.reshape(1, -1))
    assert out.shape == (B, S, embed_size)
    np.testing.assert_allclose(np.asarray(out), np.asarray(ref), rtol=1e-4, atol=1e-4)

    print("KERNEL_OK")
</pallas_src>

<mosaic_0001>
module attributes {stable_mosaic.version = 11 : i64} {
  func.func @_continuous_encoding_kernel(%arg0: i32, %arg1: memref<8x24xf32, #tpu.memory_space<vmem>>, %arg2: memref<24x512xf32, #tpu.memory_space<vmem>>, %arg3: memref<8x512xf32, #tpu.memory_space<vmem>>) attributes {dimension_semantics = [#tpu.dimension_semantics<parallel>], iteration_bounds = array<i64: 1>, scalar_prefetch = 0 : i64, scratch_operands = 0 : i64, tpu.core_type = #tpu.core_type<tc>, window_params = [{transform_indices = @transform_0, window_bounds = array<i64: 8, 24>}, {pipeline_mode = #tpu.pipeline_mode<synchronous>, transform_indices = @transform_1, window_bounds = array<i64: 24, 512>}, {transform_indices = @transform_2, window_bounds = array<i64: 8, 512>}]} {
    %c0 = arith.constant 0 : index
    %c0_0 = arith.constant 0 : index
    %0 = vector.load %arg1[%c0, %c0_0] : memref<8x24xf32, #tpu.memory_space<vmem>>, vector<8x24xf32>
    %c0_1 = arith.constant 0 : index
    %c0_2 = arith.constant 0 : index
    %1 = vector.load %arg2[%c0_1, %c0_2] : memref<24x512xf32, #tpu.memory_space<vmem>>, vector<24x512xf32>
    %cst = arith.constant dense<0.000000e+00> : vector<8x512xf32>
    %2 = tpu.matmul %0, %1, %cst {dimension_numbers = #tpu.dot_dimension_numbers<[1], [0], [0], [1], [0, 0, 1, 1], [], []>} : vector<8x24xf32>, vector<24x512xf32>, vector<8x512xf32> -> vector<8x512xf32>
    %3 = math.cos %2 : vector<8x512xf32>
    %cst_3 = arith.constant 0.176776692 : f32
    %4 = vector.broadcast %cst_3 : f32 to vector<8x512xf32>
    %5 = arith.mulf %4, %3 : vector<8x512xf32>
    %c0_4 = arith.constant 0 : index
    %c0_5 = arith.constant 0 : index
    %6 = vector.load %arg3[%c0_4, %c0_5] : memref<8x512xf32, #tpu.memory_space<vmem>>, vector<8x512xf32>
    tpu.vector_store %arg3[%c0_4, %c0_5], %5 {strides = array<i32>} : memref<8x512xf32, #tpu.memory_space<vmem>>, vector<8x512xf32>,
    return
  }
  func.func @transform_0(%arg0: i32) -> (i32, i32) {
    %c0_i32 = arith.constant 0 : i32
    %c0_i32_0 = arith.constant 0 : i32
    return %arg0, %c0_i32 : i32, i32
  }
  func.func @transform_1(%arg0: i32) -> (i32, i32) {
    %c0_i32 = arith.constant 0 : i32
    %c0_i32_0 = arith.constant 0 : i32
    %c0_i32_1 = arith.constant 0 : i32
    return %c0_i32, %c0_i32_0 : i32, i32
  }
  func.func @transform_2(%arg0: i32) -> (i32, i32) {
    %c0_i32 = arith.constant 0 : i32
    %c0_i32_0 = arith.constant 0 : i32
    return %arg0, %c0_i32 : i32, i32
  }
}

</mosaic_0001>

<llo_original>
// kernel: tpu_custom_call.1
$region0: #{tpu_custom_call.1}
  #allocation0 [shape = 'u32[]', space=smem, size = 0x4, offset = 0x4, fixed_abs, tag = 'smem constant byte address 0x4 - core index']
  #allocation1 [shape = 'u32[144,128]{1,0:T(1,128)}', space=vmem, size = 0x12000, scoped, tag = 'internal scratch']
  %s0 = inlined_call_operand.hbm [shape: f32[8,24], index: 0, kind: input, shape index: {}]
  %s1 = inlined_call_operand.hbm [shape: f32[24,512], index: 1, kind: input, shape index: {}]
  %s2 = inlined_call_operand.hbm [shape: f32[8,512], index: 2, kind: output, shape index: {}]
  %s3 = sld [smem:[#allocation0]]
  $region26: #{tpu_custom_call.1} parent=0
    _
  %s5 = ssub.s32 1, %s3
  %s6 = scalar_select 0, %s5, %s3
  $region1: #{tpu_custom_call.1} parent=0
    #allocation2 [shape = 'u8[4096]{0}', space=vmem, size = 0x1000, scoped, tag = 'input window, operand 0, single buffered']
    #allocation3 [shape = 's32[1]{0}', space=sflag, size = 0x4, scoped, tag = 'scoped memory for tpu_custom_call.1']
    #allocation4 [shape = 's32[1]{0}', space=sflag, size = 0x4, scoped, tag = 'scoped memory for tpu_custom_call.1']
    #allocation5 [shape = 'u8[49152]{0}', space=vmem, size = 0xc000, scoped, tag = 'input window, operand 1, single buffered']
    #allocation6 [shape = 's32[1]{0}', space=sflag, size = 0x4, scoped, tag = 'scoped memory for tpu_custom_call.1']
    #allocation7 [shape = 'u8[16384]{0}', space=vmem, size = 0x4000, scoped, tag = 'output window, operand 0, single buffered']
    %7 = vsyncpa [#allocation3], 0
    %8 = vsyncpa [#allocation6], 0
    %9 = vsyncpa [#allocation4], 0
    // Predicated region
    $region2: #{tpu_custom_call.1} parent=1 // pred_check
      _
    $region3: #{tpu_custom_call.1} parent=1 // pred_check_branch
      %11 = sbr.rel (0) target = $region5
    $region4: #{tpu_custom_call.1} parent=1 // pred_region
      %s13 = ssub.s32 128, 128
      %14 = vsyncadd [#allocation3], %s13
      %s16 = sshll.u32 [#allocation2], 4
      %s17 = int_to_ptr.vmem [resolvable:$true] %s16
      %19 = dma.hbm_to_vmem [thread:$0]  %s0, 128, %s17, [#allocation3]
    $region5: #{tpu_custom_call.1} parent=1 // pred_fallthru
      _
    // Predicated region
    $region6: #{tpu_custom_call.1} parent=1 // pred_check
      _
    $region7: #{tpu_custom_call.1} parent=1 // pred_check_branch
      %21 = sbr.rel (0) target = $region9
    $region8: #{tpu_custom_call.1} parent=1 // pred_region
      %s23 = ssub.s32 1536, 1536
      %24 = vsyncadd [#allocation6], %s23
      %s25 = sshll.u32 [#allocation5], 4
      %s26 = int_to_ptr.vmem [resolvable:$true] %s25
      %31 = dma.hbm_to_vmem [thread:$0]  %s1, 1536, %s26, [#allocation6], 512, 512, 32
    $region9: #{tpu_custom_call.1} parent=1 // pred_fallthru
      _
    // Predicated region
    $region10: #{tpu_custom_call.1} parent=1 // pred_check
      _
    $region11: #{tpu_custom_call.1} parent=1 // pred_check_branch
      %33 = sbr.rel (0) target = $region13
    $region12: #{tpu_custom_call.1} parent=1 // pred_region
      %34 = dma.done [#allocation3], 128
    $region13: #{tpu_custom_call.1} parent=1 // pred_fallthru
      _
    // Predicated region
    $region14: #{tpu_custom_call.1} parent=1 // pred_check
      _
    $region15: #{tpu_custom_call.1} parent=1 // pred_check_branch
      %36 = sbr.rel (0) target = $region17
    $region16: #{tpu_custom_call.1} parent=1 // pred_region
      %37 = dma.done [#allocation6], 1536
    $region17: #{tpu_custom_call.1} parent=1 // pred_fallthru
      _
    %v38 = vld [vmem:[#allocation2] sm:$0xff]
    %v39 = vld [vmem:[#allocation5] sm:$0xff]
    %v40 = vld [vmem:[#allocation5 + $0x8] sm:$0xff]
    %v41 = vld [vmem:[#allocation5 + $0x10] sm:$0xff]
    %v42 = vld [vmem:[#allocation5 + $0x18] sm:$0xff]
    %v43 = vld [vmem:[#allocation5 + $0x20] sm:$0xff]
    %v44 = vld [vmem:[#allocation5 + $0x28] sm:$0xff]
    %v45 = vld [vmem:[#allocation5 + $0x30] sm:$0xff]
    %v46 = vld [vmem:[#allocation5 + $0x38] sm:$0xff]
    %v47 = vld [vmem:[#allocation5 + $0x40] sm:$0xff]
    %v48 = vld [vmem:[#allocation5 + $0x48] sm:$0xff]
    %v49 = vld [vmem:[#allocation5 + $0x50] sm:$0xff]
    %v50 = vld [vmem:[#allocation5 + $0x58] sm:$0xff]
    %vm51 = vcmask 195584
    %v53 = vsel %vm51, %v38, 0
    %55 = vmatprep.subr.mxu0 0.0
    %56 = vmatpush1.msra.mxu0 0.0
    %57 = vmatprep.subr.mxu0 0.0
    %58 = vmatpush1.msra.mxu0 0.0
    %59 = vmatprep.subr.mxu0 0.0
    %60 = vmatpush1.msra.mxu0 0.0
    %61 = vmatprep.subr.mxu0 0.0
    %62 = vmatpush1.msra.mxu0 0.0
    %63 = vmatprep.subr.mxu0 0.0
    %64 = vmatpush1.msra.mxu0 0.0
    %65 = vmatprep.subr.mxu0 0.0
    %66 = vmatpush1.msra.mxu0 0.0
    %67 = vmatprep.subr.mxu0 0.0
    %68 = vmatpush1.msra.mxu0 0.0
    %69 = vmatprep.subr.mxu0 0.0
    %70 = vmatpush1.msra.mxu0 0.0
    %71 = vmatprep.subr.mxu0 0.0
    %72 = vmatpush1.msra.mxu0 0.0
    %73 = vmatprep.subr.mxu0 0.0
    %74 = vmatpush1.msra.mxu0 0.0
    %75 = vmatprep.subr.mxu0 0.0
    %76 = vmatpush1.msra.mxu0 0.0
    %77 = vmatprep.subr.mxu0 0.0
    %78 = vmatpush1.msra.mxu0 0.0
    %79 = vmatprep.subr.mxu0 0.0
    %80 = vmatpush1.msra.mxu0 0.0
    %81 = vmatprep.subr.mxu0 %v48
    %82 = vmatpush1.msra.mxu0 %v47
    %83 = vmatprep.subr.mxu0 %v44
    %84 = vmatpush1.msra.mxu0 %v43
    %85 = vmatprep.subr.mxu0 %v40
    %86 = vmatpush1.msra.mxu0 %v39
    %87 = vmatprep.subr.mxu0 0.0
    %88 = vmatpush2.msra.mxu0 0.0
    %89 = vmatprep.subr.mxu0 0.0
    %90 = vmatpush2.msra.mxu0 0.0
    %91 = vmatprep.subr.mxu0 0.0
    %92 = vmatpush2.msra.mxu0 0.0
    %93 = vmatprep.subr.mxu0 0.0
    %94 = vmatpush2.msra.mxu0 0.0
    %95 = vmatprep.subr.mxu0 0.0
    %96 = vmatpush2.msra.mxu0 0.0
    %97 = vmatprep.subr.mxu0 0.0
    %98 = vmatpush2.msra.mxu0 0.0
    %99 = vmatprep.subr.mxu0 0.0
    %100 = vmatpush2.msra.mxu0 0.0
    %101 = vmatprep.subr.mxu0 0.0
    %102 = vmatpush2.msra.mxu0 0.0
    %103 = vmatprep.subr.mxu0 0.0
    %104 = vmatpush2.msra.mxu0 0.0
    %105 = vmatprep.subr.mxu0 0.0
    %106 = vmatpush2.msra.mxu0 0.0
    %107 = vmatprep.subr.mxu0 0.0
    %108 = vmatpush2.msra.mxu0 0.0
    %109 = vmatprep.subr.mxu0 0.0
    %110 = vmatpush2.msra.mxu0 0.0
    %111 = vmatprep.subr.mxu0 0.0
    %112 = vmatpush2.msra.mxu0 0.0
    %113 = vmatprep.subr.mxu0 0.0
    %114 = vmatpush2.msra.mxu0 0.0
    %115 = vmatprep.subr.mxu0 0.0
    %116 = vmatpush2.msra.mxu0 0.0
    %117 = vmatprep.subr.mxu0 0.0
    %118 = vmatpush2.msra.mxu0 0.0
    %119 = vmatprep.mubr.f32.mxu0 0.0
    %120 = vmatmul.mubr.f32.gmra.mxu0 %v53
    %v121 = vpop.f32.mrf.mxu0
    %v122 = vadd.f32 0.0, %v121
    %v123 = vpop.f32.mrf.mxu0
    %v124 = vadd.f32 0.0, %v123
    %125 = vdwg.mxu0
    %126 = vmatprep.subr.mxu0 0.0
    %127 = vmatpush1.msra.mxu0 0.0
    %128 = vmatprep.subr.mxu0 0.0
    %129 = vmatpush1.msra.mxu0 0.0
    %130 = vmatprep.subr.mxu0 0.0
    %131 = vmatpush1.msra.mxu0 0.0
    %132 = vmatprep.subr.mxu0 0.0
    %133 = vmatpush1.msra.mxu0 0.0
    %134 = vmatprep.subr.mxu0 0.0
    %135 = vmatpush1.msra.mxu0 0.0
    %136 = vmatprep.subr.mxu0 0.0
    %137 = vmatpush1.msra.mxu0 0.0
    %138 = vmatprep.subr.mxu0 0.0
    %139 = vmatpush1.msra.mxu0 0.0
    %140 = vmatprep.subr.mxu0 0.0
    %141 = vmatpush1.msra.mxu0 0.0
    %142 = vmatprep.subr.mxu0 0.0
    %143 = vmatpush1.msra.mxu0 0.0
    %144 = vmatprep.subr.mxu0 0.0
    %145 = vmatpush1.msra.mxu0 0.0
    %146 = vmatprep.subr.mxu0 0.0
    %147 = vmatpush1.msra.mxu0 0.0
    %148 = vmatprep.subr.mxu0 0.0
    %149 = vmatpush1.msra.mxu0 0.0
    %150 = vmatprep.subr.mxu0 0.0
    %151 = vmatpush1.msra.mxu0 0.0
    %152 = vmatprep.subr.mxu0 %v50
    %153 = vmatpush1.msra.mxu0 %v49
    %154 = vmatprep.subr.mxu0 %v46
    %155 = vmatpush1.msra.mxu0 %v45
    %156 = vmatprep.subr.mxu0 %v42
    %157 = vmatpush1.msra.mxu0 %v41
    %158 = vmatprep.subr.mxu0 0.0
    %159 = vmatpush2.msra.mxu0 0.0
    %160 = vmatprep.subr.mxu0 0.0
    %161 = vmatpush2.msra.mxu0 0.0
    %162 = vmatprep.subr.mxu0 0.0
    %163 = vmatpush2.msra.mxu0 0.0
    %164 = vmatprep.subr.mxu0 0.0
    %165 = vmatpush2.msra.mxu0 0.0
    %166 = vmatprep.subr.mxu0 0.0
    %167 = vmatpush2.msra.mxu0 0.0
    %168 = vmatprep.subr.mxu0 0.0
    %169 = vmatpush2.msra.mxu0 0.0
    %170 = vmatprep.subr.mxu0 0.0
    %171 = vmatpush2.msra.mxu0 0.0
    %172 = vmatprep.subr.mxu0 0.0
    %173 = vmatpush2.msra.mxu0 0.0
    %174 = vmatprep.subr.mxu0 0.0
    %175 = vmatpush2.msra.mxu0 0.0
    %176 = vmatprep.subr.mxu0 0.0
    %177 = vmatpush2.msra.mxu0 0.0
    %178 = vmatprep.subr.mxu0 0.0
    %179 = vmatpush2.msra.mxu0 0.0
    %180 = vmatprep.subr.mxu0 0.0
    %181 = vmatpush2.msra.mxu0 0.0
    %182 = vmatprep.subr.mxu0 0.0
    %183 = vmatpush2.msra.mxu0 0.0
    %184 = vmatprep.subr.mxu0 0.0
    %185 = vmatpush2.msra.mxu0 0.0
    %186 = vmatprep.subr.mxu0 0.0
    %187 = vmatpush2.msra.mxu0 0.0
    %188 = vmatprep.subr.mxu0 0.0
    %189 = vmatpush2.msra.mxu0 0.0
    %190 = vmatprep.mubr.f32.mxu0 0.0
    %191 = vmatmul.mubr.f32.gmra.mxu0 %v53
    %v192 = vpop.f32.mrf.mxu0
    %v193 = vadd.f32 0.0, %v192
    %v194 = vpop.f32.mrf.mxu0
    %v195 = vadd.f32 0.0, %v194
    %196 = vdwg.mxu0
    %v197 = vand.u32 2147483647, %v122
    %vm198 = vcmp.le.f32.partialorder %v197, 0.7853982
    %vm199 = vcmp.lt.s32.totalorder %v122, 0
    %v200 = vand.u32 %v122, 2139095040
    %v201 = vshrl.u32 %v200, 23
    %v202 = vsub.s32 %v201, 127
    %v203 = vand.u32 2147483647, %v122
    %v204 = vand.u32 %v203, 8388607
    %v205 = vor.u32 %v204, 8388608
    %v206 = vsub.s32 0, %v205
    %v207 = vadd.s32 %v202, 1
    %vm208 = vcmp.gt.s32.totalorder %v207, 0
    %v209 = vsel %vm208, %v207, 0
    %v210 = vshrl.u32 %v209, 5
    %v211 = vand.u32 %v209, 31
    %v212 = vsub.s32 32, %v211
    %v213 = vshrl.u32 683565275, %v212
    %v214 = vshll.u32 683565275, %v211
    %v215 = vshrl.u32 2475754826, %v212
    %v216 = vor.u32 %v214, %v215
    %v217 = vshll.u32 2475754826, %v211
    %v218 = vshrl.u32 2131351028, %v212
    %v219 = vor.u32 %v217, %v218
    %v220 = vshll.u32 2131351028, %v211
    %v221 = vshrl.u32 2102212464, %v212
    %v222 = vor.u32 %v220, %v221
    %v223 = vshll.u32 2102212464, %v211
    %v224 = vshrl.u32 920167782, %v212
    %v225 = vor.u32 %v223, %v224
    %v226 = vshll.u32 920167782, %v211
    %v227 = vshrl.u32 1326507024, %v212
    %v228 = vor.u32 %v226, %v227
    %vm229 = vcmp.lt.s32.totalorder %v210, 1
    %vm230 = vcmp.lt.s32.totalorder %v210, 2
    %vm231 = vcmp.lt.s32.totalorder %v210, 3
    %vm232 = vcmp.lt.s32.totalorder %v210, 4
    %v233 = vsel %vm229, %v213, %v216
    %v234 = vsel %vm232, %v222, 2102212464
    %v235 = vsel %vm231, %v219, %v234
    %v236 = vsel %vm230, %v233, %v235
    %v237 = vsel %vm229, %v216, %v219
    %v238 = vsel %vm232, %v225, 920167782
    %v239 = vsel %vm231, %v222, %v238
    %v240 = vsel %vm230, %v237, %v239
    %v241 = vsel %vm229, %v219, %v222
    %v242 = vsel %vm232, %v228, 1326507024
    %v243 = vsel %vm231, %v225, %v242
    %v244 = vsel %vm230, %v241, %v243
    %v245 = vshll.u32 %v205, 8
    %v246 = vmul.u32.u64.compose %v245, %v244
    %v247 = vextract.low.u32 %v246
    %v248 = vextract.high.u32 %v246
    %v249 = vmul.u32.u64.compose %v245, %v240
    %v250 = vextract.low.u32 %v249
    %v251 = vextract.high.u32 %v249
    %v252 = vmul.u32 %v245, %v236
    %v253 = vadd.s32 %v248, %v250
    %vm254 = vc.u32 %v248, %v250
    %v255 = vadd.s32 %v251, 1
    %v256 = vsel %vm254, %v255, %v251
    %v257 = vadd.s32 %v252, %v256
    %v258 = vadd.s32 %v257, 536870912
    %v259 = vshrl.u32 %v258, 30
    %v260 = vshll.u32 %v259, 30
    %v261 = vsub.s32 %v257, %v260
    %vm262 = vcmp.lt.s32.totalorder %v261, 0
    %v263 = vsub.s32 0, %v261
    %v264 = vsel %vm262, %v263, %v261
    %v265 = vclz %v264
    %v266 = vsub.s32 %v265, 2
    %vm267 = vcmp.gt.s32.totalorder 0, %v266
    %v268 = vsel %vm267, 0, %v266
    %v269 = vsub.s32 32, %v268
    %v270 = vshll.u32 %v261, %v268
    %v271 = vshrl.u32 %v253, %v269
    %v272 = vor.u32 %v270, %v271
    %v273 = vsub.s32 4294967266, %v268
    %v274 = vadd.s32 %v273, 127
    %v275 = vshll.u32 %v274, 23
    %v276 = vor.u32 4788187, %v275
    %v277 = vand.u32 2147483647, %v276
    %v279 = vcvt.s32.f32 %v272
    %v280 = vmul.f32 %v279, %v277
    %v281 = vxor.u32 %v280, 2147483648
    %v282 = vsel %vm199, %v281, %v280
    %v283 = vsub.s32 4, %v259
    %v284 = vsel %vm199, %v283, %v259
    %v285 = vsel %vm198, %v122, %v282
    %v286 = vsel %vm198, 0, %v284
    %v287 = vcosq.f32.pop %v285
    %v288 = vsinq.f32.pop %v285
    %vm289 = vweird.f32 %v122
    %v290 = vand.u32 %v286, 3
    %vm291 = vcmp.lt.s32.totalorder %v290, 2
    %vm292 = vcmp.eq.s32.totalorder %v290, 0
    %v293 = vxor.u32 %v288, 2147483648
    %v294 = vsel %vm292, %v287, %v293
    %vm295 = vcmp.eq.s32.totalorder %v290, 2
    %v296 = vxor.u32 %v287, 2147483648
    %v297 = vsel %vm295, %v296, %v288
    %v298 = vsel %vm291, %v294, %v297
    %v299 = vsel %vm289, nan, %v298
    %v300 = vand.u32 2147483647, %v124
    %vm301 = vcmp.le.f32.partialorder %v300, 0.7853982
    %vm302 = vcmp.lt.s32.totalorder %v124, 0
    %v303 = vand.u32 %v124, 2139095040
    %v304 = vshrl.u32 %v303, 23
    %v305 = vsub.s32 %v304, 127
    %v306 = vand.u32 2147483647, %v124
    %v307 = vand.u32 %v306, 8388607
    %v308 = vor.u32 %v307, 8388608
    %v309 = vsub.s32 0, %v308
    %v310 = vadd.s32 %v305, 1
    %vm311 = vcmp.gt.s32.totalorder %v310, 0
    %v312 = vsel %vm311, %v310, 0
    %v313 = vshrl.u32 %v312, 5
    %v314 = vand.u32 %v312, 31
    %v315 = vsub.s32 32, %v314
    %v316 = vshrl.u32 683565275, %v315
    %v317 = vshll.u32 683565275, %v314
    %v318 = vshrl.u32 2475754826, %v315
    %v319 = vor.u32 %v317, %v318
    %v320 = vshll.u32 2475754826, %v314
    %v321 = vshrl.u32 2131351028, %v315
    %v322 = vor.u32 %v320, %v321
    %v323 = vshll.u32 2131351028, %v314
    %v324 = vshrl.u32 2102212464, %v315
    %v325 = vor.u32 %v323, %v324
    %v326 = vshll.u32 2102212464, %v314
    %v327 = vshrl.u32 920167782, %v315
    %v328 = vor.u32 %v326, %v327
    %v329 = vshll.u32 920167782, %v314
    %v330 = vshrl.u32 1326507024, %v315
    %v331 = vor.u32 %v329, %v330
    %vm332 = vcmp.lt.s32.totalorder %v313, 1
    %vm333 = vcmp.lt.s32.totalorder %v313, 2
    %vm334 = vcmp.lt.s32.totalorder %v313, 3
    %vm335 = vcmp.lt.s32.totalorder %v313, 4
    %v336 = vsel %vm332, %v316, %v319
    %v337 = vsel %vm335, %v325, 2102212464
    %v338 = vsel %vm334, %v322, %v337
    %v339 = vsel %vm333, %v336, %v338
    %v340 = vsel %vm332, %v319, %v322
    %v341 = vsel %vm335, %v328, 920167782
    %v342 = vsel %vm334, %v325, %v341
    %v343 = vsel %vm333, %v340, %v342
    %v344 = vsel %vm332, %v322, %v325
    %v345 = vsel %vm335, %v331, 1326507024
    %v346 = vsel %vm334, %v328, %v345
    %v347 = vsel %vm333, %v344, %v346
    %v348 = vshll.u32 %v308, 8
    %v349 = vmul.u32.u64.compose %v348, %v347
    %v350 = vextract.low.u32 %v349
    %v351 = vextract.high.u32 %v349
    %v352 = vmul.u32.u64.compose %v348, %v343
    %v353 = vextract.low.u32 %v352
    %v354 = vextract.high.u32 %v352
    %v355 = vmul.u32 %v348, %v339
    %v356 = vadd.s32 %v351, %v353
    %vm357 = vc.u32 %v351, %v353
    %v358 = vadd.s32 %v354, 1
    %v359 = vsel %vm357, %v358, %v354
    %v360 = vadd.s32 %v355, %v359
    %v361 = vadd.s32 %v360, 536870912
    %v362 = vshrl.u32 %v361, 30
    %v363 = vshll.u32 %v362, 30
    %v364 = vsub.s32 %v360, %v363
    %vm365 = vcmp.lt.s32.totalorder %v364, 0
    %v366 = vsub.s32 0, %v364
    %v367 = vsel %vm365, %v366, %v364
    %v368 = vclz %v367
    %v369 = vsub.s32 %v368, 2
    %vm370 = vcmp.gt.s32.totalorder 0, %v369
    %v371 = vsel %vm370, 0, %v369
    %v372 = vsub.s32 32, %v371
    %v373 = vshll.u32 %v364, %v371
    %v374 = vshrl.u32 %v356, %v372
    %v375 = vor.u32 %v373, %v374
    %v376 = vsub.s32 4294967266, %v371
    %v377 = vadd.s32 %v376, 127
    %v378 = vshll.u32 %v377, 23
    %v379 = vor.u32 4788187, %v378
    %v380 = vand.u32 2147483647, %v379
    %v382 = vcvt.s32.f32 %v375
    %v383 = vmul.f32 %v382, %v380
    %v384 = vxor.u32 %v383, 2147483648
    %v385 = vsel %vm302, %v384, %v383
    %v386 = vsub.s32 4, %v362
    %v387 = vsel %vm302, %v386, %v362
    %v388 = vsel %vm301, %v124, %v385
    %v389 = vsel %vm301, 0, %v387
    %v390 = vcosq.f32.pop %v388
    %v391 = vsinq.f32.pop %v388
    %vm392 = vweird.f32 %v124
    %v393 = vand.u32 %v389, 3
    %vm394 = vcmp.lt.s32.totalorder %v393, 2
    %vm395 = vcmp.eq.s32.totalorder %v393, 0
    %v396 = vxor.u32 %v391, 2147483648
    %v397 = vsel %vm395, %v390, %v396
    %vm398 = vcmp.eq.s32.totalorder %v393, 2
    %v399 = vxor.u32 %v390, 2147483648
    %v400 = vsel %vm398, %v399, %v391
    %v401 = vsel %vm394, %v397, %v400
    %v402 = vsel %vm392, nan, %v401
    %v403 = vand.u32 2147483647, %v193
    %vm404 = vcmp.le.f32.partialorder %v403, 0.7853982
    %vm405 = vcmp.lt.s32.totalorder %v193, 0
    %v406 = vand.u32 %v193, 2139095040
    %v407 = vshrl.u32 %v406, 23
    %v408 = vsub.s32 %v407, 127
    %v409 = vand.u32 2147483647, %v193
    %v410 = vand.u32 %v409, 8388607
    %v411 = vor.u32 %v410, 8388608
    %v412 = vsub.s32 0, %v411
    %v413 = vadd.s32 %v408, 1
    %vm414 = vcmp.gt.s32.totalorder %v413, 0
    %v415 = vsel %vm414, %v413, 0
    %v416 = vshrl.u32 %v415, 5
    %v417 = vand.u32 %v415, 31
    %v418 = vsub.s32 32, %v417
    %v419 = vshrl.u32 683565275, %v418
    %v420 = vshll.u32 683565275, %v417
    %v421 = vshrl.u32 2475754826, %v418
    %v422 = vor.u32 %v420, %v421
    %v423 = vshll.u32 2475754826, %v417
    %v424 = vshrl.u32 2131351028, %v418
    %v425 = vor.u32 %v423, %v424
    %v426 = vshll.u32 2131351028, %v417
    %v427 = vshrl.u32 2102212464, %v418
    %v428 = vor.u32 %v426, %v427
    %v429 = vshll.u32 2102212464, %v417
    %v430 = vshrl.u32 920167782, %v418
    %v431 = vor.u32 %v429, %v430
    %v432 = vshll.u32 920167782, %v417
    %v433 = vshrl.u32 1326507024, %v418
    %v434 = vor.u32 %v432, %v433
    %vm435 = vcmp.lt.s32.totalorder %v416, 1
    %vm436 = vcmp.lt.s32.totalorder %v416, 2
    %vm437 = vcmp.lt.s32.totalorder %v416, 3
    %vm438 = vcmp.lt.s32.totalorder %v416, 4
    %v439 = vsel %vm435, %v419, %v422
    %v440 = vsel %vm438, %v428, 2102212464
    %v441 = vsel %vm437, %v425, %v440
    %v442 = vsel %vm436, %v439, %v441
    %v443 = vsel %vm435, %v422, %v425
    %v444 = vsel %vm438, %v431, 920167782
    %v445 = vsel %vm437, %v428, %v444
    %v446 = vsel %vm436, %v443, %v445
    %v447 = vsel %vm435, %v425, %v428
    %v448 = vsel %vm438, %v434, 1326507024
    %v449 = vsel %vm437, %v431, %v448
    %v450 = vsel %vm436, %v447, %v449
    %v451 = vshll.u32 %v411, 8
    %v452 = vmul.u32.u64.compose %v451, %v450
    %v453 = vextract.low.u32 %v452
    %v454 = vextract.high.u32 %v452
    %v455 = vmul.u32.u64.compose %v451, %v446
    %v456 = vextract.low.u32 %v455
    %v457 = vextract.high.u32 %v455
    %v458 = vmul.u32 %v451, %v442
    %v459 = vadd.s32 %v454, %v456
    %vm460 = vc.u32 %v454, %v456
    %v461 = vadd.s32 %v457, 1
    %v462 = vsel %vm460, %v461, %v457
    %v463 = vadd.s32 %v458, %v462
    %v464 = vadd.s32 %v463, 536870912
    %v465 = vshrl.u32 %v464, 30
    %v466 = vshll.u32 %v465, 30
    %v467 = vsub.s32 %v463, %v466
    %vm468 = vcmp.lt.s32.totalorder %v467, 0
    %v469 = vsub.s32 0, %v467
    %v470 = vsel %vm468, %v469, %v467
    %v471 = vclz %v470
    %v472 = vsub.s32 %v471, 2
    %vm473 = vcmp.gt.s32.totalorder 0, %v472
    %v474 = vsel %vm473, 0, %v472
    %v475 = vsub.s32 32, %v474
    %v476 = vshll.u32 %v467, %v474
    %v477 = vshrl.u32 %v459, %v475
    %v478 = vor.u32 %v476, %v477
    %v479 = vsub.s32 4294967266, %v474
    %v480 = vadd.s32 %v479, 127
    %v481 = vshll.u32 %v480, 23
    %v482 = vor.u32 4788187, %v481
    %v483 = vand.u32 2147483647, %v482
    %v485 = vcvt.s32.f32 %v478
    %v486 = vmul.f32 %v485, %v483
    %v487 = vxor.u32 %v486, 2147483648
    %v488 = vsel %vm405, %v487, %v486
    %v489 = vsub.s32 4, %v465
    %v490 = vsel %vm405, %v489, %v465
    %v491 = vsel %vm404, %v193, %v488
    %v492 = vsel %vm404, 0, %v490
    %v493 = vcosq.f32.pop %v491
    %v494 = vsinq.f32.pop %v491
    %vm495 = vweird.f32 %v193
    %v496 = vand.u32 %v492, 3
    %vm497 = vcmp.lt.s32.totalorder %v496, 2
    %vm498 = vcmp.eq.s32.totalorder %v496, 0
    %v499 = vxor.u32 %v494, 2147483648
    %v500 = vsel %vm498, %v493, %v499
    %vm501 = vcmp.eq.s32.totalorder %v496, 2
    %v502 = vxor.u32 %v493, 2147483648
    %v503 = vsel %vm501, %v502, %v494
    %v504 = vsel %vm497, %v500, %v503
    %v505 = vsel %vm495, nan, %v504
    %v506 = vand.u32 2147483647, %v195
    %vm507 = vcmp.le.f32.partialorder %v506, 0.7853982
    %vm508 = vcmp.lt.s32.totalorder %v195, 0
    %v509 = vand.u32 %v195, 2139095040
    %v510 = vshrl.u32 %v509, 23
    %v511 = vsub.s32 %v510, 127
    %v512 = vand.u32 2147483647, %v195
    %v513 = vand.u32 %v512, 8388607
    %v514 = vor.u32 %v513, 8388608
    %v515 = vsub.s32 0, %v514
    %v516 = vadd.s32 %v511, 1
    %vm517 = vcmp.gt.s32.totalorder %v516, 0
    %v518 = vsel %vm517, %v516, 0
    %v519 = vshrl.u32 %v518, 5
    %v520 = vand.u32 %v518, 31
    %v521 = vsub.s32 32, %v520
    %v522 = vshrl.u32 683565275, %v521
    %v523 = vshll.u32 683565275, %v520
    %v524 = vshrl.u32 2475754826, %v521
    %v525 = vor.u32 %v523, %v524
    %v526 = vshll.u32 2475754826, %v520
    %v527 = vshrl.u32 2131351028, %v521
    %v528 = vor.u32 %v526, %v527
    %v529 = vshll.u32 2131351028, %v520
    %v530 = vshrl.u32 2102212464, %v521
    %v531 = vor.u32 %v529, %v530
    %v532 = vshll.u32 2102212464, %v520
    %v533 = vshrl.u32 920167782, %v521
    %v534 = vor.u32 %v532, %v533
    %v535 = vshll.u32 920167782, %v520
    %v536 = vshrl.u32 1326507024, %v521
    %v537 = vor.u32 %v535, %v536
    %vm538 = vcmp.lt.s32.totalorder %v519, 1
    %vm539 = vcmp.lt.s32.totalorder %v519, 2
    %vm540 = vcmp.lt.s32.totalorder %v519, 3
    %vm541 = vcmp.lt.s32.totalorder %v519, 4
    %v542 = vsel %vm538, %v522, %v525
    %v543 = vsel %vm541, %v531, 2102212464
    %v544 = vsel %vm540, %v528, %v543
    %v545 = vsel %vm539, %v542, %v544
    %v546 = vsel %vm538, %v525, %v528
    %v547 = vsel %vm541, %v534, 920167782
    %v548 = vsel %vm540, %v531, %v547
    %v549 = vsel %vm539, %v546, %v548
    %v550 = vsel %vm538, %v528, %v531
    %v551 = vsel %vm541, %v537, 1326507024
    %v552 = vsel %vm540, %v534, %v551
    %v553 = vsel %vm539, %v550, %v552
    %v554 = vshll.u32 %v514, 8
    %v555 = vmul.u32.u64.compose %v554, %v553
    %v556 = vextract.low.u32 %v555
    %v557 = vextract.high.u32 %v555
    %v558 = vmul.u32.u64.compose %v554, %v549
    %v559 = vextract.low.u32 %v558
    %v560 = vextract.high.u32 %v558
    %v561 = vmul.u32 %v554, %v545
    %v562 = vadd.s32 %v557, %v559
    %vm563 = vc.u32 %v557, %v559
    %v564 = vadd.s32 %v560, 1
    %v565 = vsel %vm563, %v564, %v560
    %v566 = vadd.s32 %v561, %v565
    %v567 = vadd.s32 %v566, 536870912
    %v568 = vshrl.u32 %v567, 30
    %v569 = vshll.u32 %v568, 30
    %v570 = vsub.s32 %v566, %v569
    %vm571 = vcmp.lt.s32.totalorder %v570, 0
    %v572 = vsub.s32 0, %v570
    %v573 = vsel %vm571, %v572, %v570
    %v574 = vclz %v573
    %v575 = vsub.s32 %v574, 2
    %vm576 = vcmp.gt.s32.totalorder 0, %v575
    %v577 = vsel %vm576, 0, %v575
    %v578 = vsub.s32 32, %v577
    %v579 = vshll.u32 %v570, %v577
    %v580 = vshrl.u32 %v562, %v578
    %v581 = vor.u32 %v579, %v580
    %v582 = vsub.s32 4294967266, %v577
    %v583 = vadd.s32 %v582, 127
    %v584 = vshll.u32 %v583, 23
    %v585 = vor.u32 4788187, %v584
    %v586 = vand.u32 2147483647, %v585
    %v588 = vcvt.s32.f32 %v581
    %v589 = vmul.f32 %v588, %v586
    %v590 = vxor.u32 %v589, 2147483648
    %v591 = vsel %vm508, %v590, %v589
    %v592 = vsub.s32 4, %v568
    %v593 = vsel %vm508, %v592, %v568
    %v594 = vsel %vm507, %v195, %v591
    %v595 = vsel %vm507, 0, %v593
    %v596 = vcosq.f32.pop %v594
    %v597 = vsinq.f32.pop %v594
    %vm598 = vweird.f32 %v195
    %v599 = vand.u32 %v595, 3
    %vm600 = vcmp.lt.s32.totalorder %v599, 2
    %vm601 = vcmp.eq.s32.totalorder %v599, 0
    %v602 = vxor.u32 %v597, 2147483648
    %v603 = vsel %vm601, %v596, %v602
    %vm604 = vcmp.eq.s32.totalorder %v599, 2
    %v605 = vxor.u32 %v596, 2147483648
    %v606 = vsel %vm604, %v605, %v597
    %v607 = vsel %vm600, %v603, %v606
    %v608 = vsel %vm598, nan, %v607
    %v609 = vmul.f32 %v299, 0.17677669
    %v610 = vmul.f32 %v402, 0.17677669
    %v611 = vmul.f32 %v505, 0.17677669
    %v612 = vmul.f32 %v608, 0.17677669
    %613 = vst [vmem:[#allocation7] sm:$0xff] %v609
    %614 = vst [vmem:[#allocation7 + $0x8] sm:$0xff] %v610
    %615 = vst [vmem:[#allocation7 + $0x10] sm:$0xff] %v611
    %616 = vst [vmem:[#allocation7 + $0x18] sm:$0xff] %v612
    // Predicated region
    $region18: #{tpu_custom_call.1} parent=1 // pred_check
      _
    $region19: #{tpu_custom_call.1} parent=1 // pred_check_branch
      %618 = sbr.rel (0) target = $region21
    $region20: #{tpu_custom_call.1} parent=1 // pred_region
      %s620 = ssub.s32 512, 512
      %621 = vsyncadd [#allocation4], %s620
      %s623 = sshll.u32 [#allocation7], 4
      %s624 = int_to_ptr.vmem [resolvable:$true] %s623
      %626 = dma.vmem_to_hbm [thread:$0]  %s624, 512, %s2, [#allocation4]
    $region21: #{tpu_custom_call.1} parent=1 // pred_fallthru
      _
    // Predicated region
    $region22: #{tpu_custom_call.1} parent=1 // pred_check
      _
    $region23: #{tpu_custom_call.1} parent=1 // pred_check_branch
      %628 = sbr.rel (0) target = $region25
    $region24: #{tpu_custom_call.1} parent=1 // pred_region
      %629 = dma.done [#allocation4], 512
    $region25: #{tpu_custom_call.1} parent=1 // pred_fallthru
      _
    %630 = vsyncpa [#allocation3], 1
    %631 = vsyncpa [#allocation6], 1
    %632 = vsyncpa [#allocation4], 1

</llo_original>
